<compile_context>
chip_gen: v7x
topology: tpu7x:2x2x1
jax: 0.10.0
libtpu: 0.0.40
codegen_flags: <defaults>
</compile_context>

<pallas_src>
import jax
import jax.numpy as jnp
from jax import lax
from jax.experimental import pallas as pl
from jax.experimental.pallas import tpu as pltpu

IN_DIM = 768          # fixed by the module (nn.Linear(768, K))
EPS = 1e-12           # F.normalize default eps
_SUBLANE = 8
_LANE = 128
_F32_BYTES = 4


def _round_up(x: int, m: int) -> int:
    return ((x + m - 1) // m) * m


def _pca_projector_kernel(x_ref, wt_ref, o_ref):
    # x_ref:  [TN, 768]  input row tile (last grid step may hold stale rows
    #                    beyond the valid range; they are row-independent and
    #                    their output rows are masked out on writeback)
    # wt_ref: [768, K]   transposed projection matrix (resident, single-buffered)
    # o_ref:  [TN, K]
    y = jnp.dot(x_ref[...], wt_ref[...], preferred_element_type=jnp.float32)
    sq = jnp.sum(y * y, axis=1, keepdims=True)                # [TN, 1]
    # rsqrt on the EUP + broadcast multiply; clamping sq at EPS^2 is exactly
    # equivalent to dividing by max(||y||, EPS) (zero rows stay zero).
    inv = lax.rsqrt(jnp.maximum(sq, EPS * EPS))
    o_ref[...] = y * inv


def _vmem_capacity_bytes() -> int:
    """Per-TensorCore VMEM capacity; conservative fallback if unqueryable."""
    try:
        cap = int(pltpu.get_tpu_info().vmem_capacity_bytes)
        if cap > 0:
            return cap
    except Exception:
        pass
    return 64 * 1024 * 1024   # v7x per-TC VMEM (the smallest current part)


def _working_set_bytes(tile_n: int, k: int) -> int:
    k_lanes = _round_up(max(k, 1), _LANE)       # VMEM buffers are lane-padded
    return (2 * tile_n * IN_DIM                 # double-buffered x tile
            + 2 * tile_n * k_lanes              # double-buffered out tile
            + IN_DIM * k_lanes                  # resident single-buffered W_T
            ) * _F32_BYTES


def _choose_tile_n(n: int, k: int, requested, budget: int) -> int:
    n8 = _round_up(max(n, 1), _SUBLANE)
    if requested is not None:
        return max(min(_round_up(requested, _SUBLANE), n8), _SUBLANE)

    tile = 2048                                 # memory-bound sweet spot
    while tile > _SUBLANE and _working_set_bytes(tile, k) > budget:
        tile //= 2
    # Prefer >= 2 grid steps when the batch allows it (DMA/compute overlap and
    # row-sharding across v7x's two TensorCores), but never below 512 rows.
    while tile > 512 and -(-n8 // tile) < 2:
        tile //= 2
    return max(min(tile, n8), _SUBLANE)


def pca_projector(x: jax.Array, w: jax.Array, *, tile_n=None) -> jax.Array:
    """x: [N, 768] float32, w: [K, 768] float32 (PyTorch Linear weight layout)."""
    n, d = x.shape
    k, d2 = w.shape
    assert d == IN_DIM and d2 == IN_DIM

    cap = _vmem_capacity_bytes()
    budget = min(cap // 2, 64 * 1024 * 1024)    # ~32 MiB on v7x, ~64 MiB on v5e/v6e
    tile_n = _choose_tile_n(n, k, tile_n, budget)

    # One-time tiny transpose of the (constant) weight; independent of batch.
    w_t = w.T                                   # [768, K]

    ws = _working_set_bytes(tile_n, k)
    vmem_limit = int(min(max(ws + (16 << 20), 32 << 20), int(cap * 0.75)))

    grid = (pl.cdiv(n, tile_n),)
    out = pl.pallas_call(
        _pca_projector_kernel,
        out_shape=jax.ShapeDtypeStruct((n, k), jnp.float32),
        grid_spec=pltpu.PrefetchScalarGridSpec(
            num_scalar_prefetch=0,
            grid=grid,
            in_specs=[
                pl.BlockSpec((tile_n, IN_DIM), lambda i: (i, 0)),
                # Weight is identical for every grid step: keep it resident and
                # single-buffered (no wasted second VMEM buffer).
                pl.BlockSpec((IN_DIM, k), lambda i: (0, 0),
                             pipeline_mode=pl.Buffered(1)),
            ],
            # Last dim k equals the full array dim (legal even if k % 128 != 0);
            # ragged last row-block is masked on writeback.
            out_specs=pl.BlockSpec((tile_n, k), lambda i: (i, 0)),
        ),
        compiler_params=pltpu.CompilerParams(
            dimension_semantics=("parallel",),
            vmem_limit_bytes=vmem_limit,
        ),
    )(x, w_t)
    return out


def _reference(x, w):
    y = x @ w.T
    norm = jnp.sqrt(jnp.sum(y * y, axis=1, keepdims=True))
    return y / jnp.maximum(norm, EPS)


if __name__ == "__main__":
    key = jax.random.PRNGKey(0)
    kx, kw = jax.random.split(key)

    N = 12     # small batch; deliberately NOT a multiple of the row tile / sublane
    K = 96     # PCA component count; deliberately NOT a multiple of 128

    x = jax.random.normal(kx, (N, IN_DIM), dtype=jnp.float32)
    # Deterministic synthetic "pca_components" matrix, shape [K, 768] —
    # same layout as the torch Linear weight it is copied into.
    w = jax.random.normal(kw, (K, IN_DIM), dtype=jnp.float32) * 0.02

    out = jax.block_until_ready(pca_projector(x, w))
    ref = _reference(x, w)

    assert out.shape == (N, K)
    assert jnp.allclose(out, ref, atol=1e-5, rtol=1e-5)
    # rows should be unit-norm
    assert jnp.allclose(jnp.linalg.norm(out, axis=1), 1.0, atol=1e-5)

    print("KERNEL_OK")
</pallas_src>

<mosaic_0001>
module attributes {stable_mosaic.version = 11 : i64} {
  func.func @_pca_projector_kernel(%arg0: i32, %arg1: memref<16x768xf32, #tpu.memory_space<vmem>>, %arg2: memref<768x96xf32, #tpu.memory_space<vmem>>, %arg3: memref<16x96xf32, #tpu.memory_space<vmem>>) attributes {dimension_semantics = [#tpu.dimension_semantics<parallel>], iteration_bounds = array<i64: 1>, scalar_prefetch = 0 : i64, scratch_operands = 0 : i64, tpu.core_type = #tpu.core_type<tc>, window_params = [{transform_indices = @transform_0, window_bounds = array<i64: 16, 768>}, {pipeline_mode = #tpu.pipeline_mode<synchronous>, transform_indices = @transform_1, window_bounds = array<i64: 768, 96>}, {transform_indices = @transform_2, window_bounds = array<i64: 16, 96>}]} {
    %c0 = arith.constant 0 : index
    %c0_0 = arith.constant 0 : index
    %0 = vector.load %arg1[%c0, %c0_0] : memref<16x768xf32, #tpu.memory_space<vmem>>, vector<16x768xf32>
    %c0_1 = arith.constant 0 : index
    %c0_2 = arith.constant 0 : index
    %1 = vector.load %arg2[%c0_1, %c0_2] : memref<768x96xf32, #tpu.memory_space<vmem>>, vector<768x96xf32>
    %cst = arith.constant dense<0.000000e+00> : vector<16x96xf32>
    %2 = tpu.matmul %0, %1, %cst {dimension_numbers = #tpu.dot_dimension_numbers<[1], [0], [0], [1], [0, 0, 1, 1], [], []>} : vector<16x768xf32>, vector<768x96xf32>, vector<16x96xf32> -> vector<16x96xf32>
    %3 = arith.mulf %2, %2 : vector<16x96xf32>
    %cst_3 = arith.constant dense<0.000000e+00> : vector<16xf32>
    %4 = vector.multi_reduction <add>, %3, %cst_3 [1] : vector<16x96xf32> to vector<16xf32>
    %5 = vector.shape_cast %4 : vector<16xf32> to vector<16x1xf32>
    %cst_4 = arith.constant 1.000000e-24 : f32
    %6 = vector.broadcast %cst_4 : f32 to vector<16x1xf32>
    %7 = arith.maximumf %5, %6 : vector<16x1xf32>
    %8 = math.rsqrt %7 : vector<16x1xf32>
    %9 = vector.broadcast %8 : vector<16x1xf32> to vector<16x96xf32>
    %10 = arith.mulf %2, %9 : vector<16x96xf32>
    %c0_5 = arith.constant 0 : index
    %c0_6 = arith.constant 0 : index
    %11 = vector.load %arg3[%c0_5, %c0_6] : memref<16x96xf32, #tpu.memory_space<vmem>>, vector<16x96xf32>
    tpu.vector_store %arg3[%c0_5, %c0_6], %10 {strides = array<i32>} : memref<16x96xf32, #tpu.memory_space<vmem>>, vector<16x96xf32>,
    return
  }
  func.func @transform_0(%arg0: i32) -> (i32, i32) {
    %c0_i32 = arith.constant 0 : i32
    %c0_i32_0 = arith.constant 0 : i32
    return %arg0, %c0_i32 : i32, i32
  }
  func.func @transform_1(%arg0: i32) -> (i32, i32) {
    %c0_i32 = arith.constant 0 : i32
    %c0_i32_0 = arith.constant 0 : i32
    %c0_i32_1 = arith.constant 0 : i32
    return %c0_i32, %c0_i32_0 : i32, i32
  }
  func.func @transform_2(%arg0: i32) -> (i32, i32) {
    %c0_i32 = arith.constant 0 : i32
    %c0_i32_0 = arith.constant 0 : i32
    return %arg0, %c0_i32 : i32, i32
  }
}

</mosaic_0001>

<llo_original>
// kernel: tpu_custom_call.1
$region0: #{tpu_custom_call.1}
  #allocation0 [shape = 'u32[]', space=smem, size = 0x4, offset = 0x4, fixed_abs, tag = 'smem constant byte address 0x4 - core index']
  #allocation1 [shape = 'u32[144,128]{1,0:T(1,128)}', space=vmem, size = 0x12000, scoped, tag = 'internal scratch']
  %s0 = inlined_call_operand.vmem [shape: f32[12,768], index: 0, kind: input, shape index: {}]
  %s1 = inlined_call_operand.vmem [shape: f32[768,96], index: 1, kind: input, shape index: {}]
  %s2 = inlined_call_operand.hbm [shape: f32[12,96], index: 2, kind: output, shape index: {}]
  %s3 = sld [smem:[#allocation0]]
  $region18: #{tpu_custom_call.1} parent=0
    _
  %s5 = ssub.s32 1, %s3
  %s6 = scalar_select 0, %s5, %s3
  $region1: #{tpu_custom_call.1} parent=0
    #allocation2 [shape = 'u8[8192]{0}', space=vmem, size = 0x2000, scoped, tag = 'output window, operand 0, single buffered']
    #allocation3 [shape = 's32[1]{0}', space=sflag, size = 0x4, scoped, tag = 'scoped memory for tpu_custom_call.1']
    %7 = vsyncpa [#allocation3], 0
    // Predicated region
    $region2: #{tpu_custom_call.1} parent=1 // pred_check
      _
    $region3: #{tpu_custom_call.1} parent=1 // pred_check_branch
      %9 = sbr.rel (0) target = $region5
    $region4: #{tpu_custom_call.1} parent=1 // pred_region
      _
    $region5: #{tpu_custom_call.1} parent=1 // pred_fallthru
      _
    // Predicated region
    $region6: #{tpu_custom_call.1} parent=1 // pred_check
      _
    $region7: #{tpu_custom_call.1} parent=1 // pred_check_branch
      %11 = sbr.rel (0) target = $region9
    $region8: #{tpu_custom_call.1} parent=1 // pred_region
      _
    $region9: #{tpu_custom_call.1} parent=1 // pred_fallthru
      _
    %v12 = vld [vmem:[%s0] sm:$0xff]
    %v13 = vld [vmem:[%s0 + $0x8] sm:$0xff]
    %v14 = vld [vmem:[%s0 + $0x10] sm:$0xff]
    %v15 = vld [vmem:[%s0 + $0x18] sm:$0xff]
    %v16 = vld [vmem:[%s0 + $0x20] sm:$0xff]
    %v17 = vld [vmem:[%s0 + $0x28] sm:$0xff]
    %v18 = vld [vmem:[%s0 + $0x30] sm:$0xff]
    %v19 = vld [vmem:[%s0 + $0x38] sm:$0xff]
    %v20 = vld [vmem:[%s0 + $0x40] sm:$0xff]
    %v21 = vld [vmem:[%s0 + $0x48] sm:$0xff]
    %v22 = vld [vmem:[%s0 + $0x50] sm:$0xff]
    %v23 = vld [vmem:[%s0 + $0x58] sm:$0xff]
    %v24 = vld [vmem:[%s1] sm:$0xff]
    %v25 = vld [vmem:[%s1 + $0x8] sm:$0xff]
    %v26 = vld [vmem:[%s1 + $0x10] sm:$0xff]
    %v27 = vld [vmem:[%s1 + $0x18] sm:$0xff]
    %v28 = vld [vmem:[%s1 + $0x20] sm:$0xff]
    %v29 = vld [vmem:[%s1 + $0x28] sm:$0xff]
    %v30 = vld [vmem:[%s1 + $0x30] sm:$0xff]
    %v31 = vld [vmem:[%s1 + $0x38] sm:$0xff]
    %v32 = vld [vmem:[%s1 + $0x40] sm:$0xff]
    %v33 = vld [vmem:[%s1 + $0x48] sm:$0xff]
    %v34 = vld [vmem:[%s1 + $0x50] sm:$0xff]
    %v35 = vld [vmem:[%s1 + $0x58] sm:$0xff]
    %v36 = vld [vmem:[%s1 + $0x60] sm:$0xff]
    %v37 = vld [vmem:[%s1 + $0x68] sm:$0xff]
    %v38 = vld [vmem:[%s1 + $0x70] sm:$0xff]
    %v39 = vld [vmem:[%s1 + $0x78] sm:$0xff]
    %v40 = vld [vmem:[%s1 + $0x80] sm:$0xff]
    %v41 = vld [vmem:[%s1 + $0x88] sm:$0xff]
    %v42 = vld [vmem:[%s1 + $0x90] sm:$0xff]
    %v43 = vld [vmem:[%s1 + $0x98] sm:$0xff]
    %v44 = vld [vmem:[%s1 + $0xa0] sm:$0xff]
    %v45 = vld [vmem:[%s1 + $0xa8] sm:$0xff]
    %v46 = vld [vmem:[%s1 + $0xb0] sm:$0xff]
    %v47 = vld [vmem:[%s1 + $0xb8] sm:$0xff]
    %v48 = vld [vmem:[%s1 + $0xc0] sm:$0xff]
    %v49 = vld [vmem:[%s1 + $0xc8] sm:$0xff]
    %v50 = vld [vmem:[%s1 + $0xd0] sm:$0xff]
    %v51 = vld [vmem:[%s1 + $0xd8] sm:$0xff]
    %v52 = vld [vmem:[%s1 + $0xe0] sm:$0xff]
    %v53 = vld [vmem:[%s1 + $0xe8] sm:$0xff]
    %v54 = vld [vmem:[%s1 + $0xf0] sm:$0xff]
    %v55 = vld [vmem:[%s1 + $0xf8] sm:$0xff]
    %v56 = vld [vmem:[%s1 + $0x100] sm:$0xff]
    %v57 = vld [vmem:[%s1 + $0x108] sm:$0xff]
    %v58 = vld [vmem:[%s1 + $0x110] sm:$0xff]
    %v59 = vld [vmem:[%s1 + $0x118] sm:$0xff]
    %v60 = vld [vmem:[%s1 + $0x120] sm:$0xff]
    %v61 = vld [vmem:[%s1 + $0x128] sm:$0xff]
    %v62 = vld [vmem:[%s1 + $0x130] sm:$0xff]
    %v63 = vld [vmem:[%s1 + $0x138] sm:$0xff]
    %v64 = vld [vmem:[%s1 + $0x140] sm:$0xff]
    %v65 = vld [vmem:[%s1 + $0x148] sm:$0xff]
    %v66 = vld [vmem:[%s1 + $0x150] sm:$0xff]
    %v67 = vld [vmem:[%s1 + $0x158] sm:$0xff]
    %v68 = vld [vmem:[%s1 + $0x160] sm:$0xff]
    %v69 = vld [vmem:[%s1 + $0x168] sm:$0xff]
    %v70 = vld [vmem:[%s1 + $0x170] sm:$0xff]
    %v71 = vld [vmem:[%s1 + $0x178] sm:$0xff]
    %v72 = vld [vmem:[%s1 + $0x180] sm:$0xff]
    %v73 = vld [vmem:[%s1 + $0x188] sm:$0xff]
    %v74 = vld [vmem:[%s1 + $0x190] sm:$0xff]
    %v75 = vld [vmem:[%s1 + $0x198] sm:$0xff]
    %v76 = vld [vmem:[%s1 + $0x1a0] sm:$0xff]
    %v77 = vld [vmem:[%s1 + $0x1a8] sm:$0xff]
    %v78 = vld [vmem:[%s1 + $0x1b0] sm:$0xff]
    %v79 = vld [vmem:[%s1 + $0x1b8] sm:$0xff]
    %v80 = vld [vmem:[%s1 + $0x1c0] sm:$0xff]
    %v81 = vld [vmem:[%s1 + $0x1c8] sm:$0xff]
    %v82 = vld [vmem:[%s1 + $0x1d0] sm:$0xff]
    %v83 = vld [vmem:[%s1 + $0x1d8] sm:$0xff]
    %v84 = vld [vmem:[%s1 + $0x1e0] sm:$0xff]
    %v85 = vld [vmem:[%s1 + $0x1e8] sm:$0xff]
    %v86 = vld [vmem:[%s1 + $0x1f0] sm:$0xff]
    %v87 = vld [vmem:[%s1 + $0x1f8] sm:$0xff]
    %v88 = vld [vmem:[%s1 + $0x200] sm:$0xff]
    %v89 = vld [vmem:[%s1 + $0x208] sm:$0xff]
    %v90 = vld [vmem:[%s1 + $0x210] sm:$0xff]
    %v91 = vld [vmem:[%s1 + $0x218] sm:$0xff]
    %v92 = vld [vmem:[%s1 + $0x220] sm:$0xff]
    %v93 = vld [vmem:[%s1 + $0x228] sm:$0xff]
    %v94 = vld [vmem:[%s1 + $0x230] sm:$0xff]
    %v95 = vld [vmem:[%s1 + $0x238] sm:$0xff]
    %v96 = vld [vmem:[%s1 + $0x240] sm:$0xff]
    %v97 = vld [vmem:[%s1 + $0x248] sm:$0xff]
    %v98 = vld [vmem:[%s1 + $0x250] sm:$0xff]
    %v99 = vld [vmem:[%s1 + $0x258] sm:$0xff]
    %v100 = vld [vmem:[%s1 + $0x260] sm:$0xff]
    %v101 = vld [vmem:[%s1 + $0x268] sm:$0xff]
    %v102 = vld [vmem:[%s1 + $0x270] sm:$0xff]
    %v103 = vld [vmem:[%s1 + $0x278] sm:$0xff]
    %v104 = vld [vmem:[%s1 + $0x280] sm:$0xff]
    %v105 = vld [vmem:[%s1 + $0x288] sm:$0xff]
    %v106 = vld [vmem:[%s1 + $0x290] sm:$0xff]
    %v107 = vld [vmem:[%s1 + $0x298] sm:$0xff]
    %v108 = vld [vmem:[%s1 + $0x2a0] sm:$0xff]
    %v109 = vld [vmem:[%s1 + $0x2a8] sm:$0xff]
    %v110 = vld [vmem:[%s1 + $0x2b0] sm:$0xff]
    %v111 = vld [vmem:[%s1 + $0x2b8] sm:$0xff]
    %v112 = vld [vmem:[%s1 + $0x2c0] sm:$0xff]
    %v113 = vld [vmem:[%s1 + $0x2c8] sm:$0xff]
    %v114 = vld [vmem:[%s1 + $0x2d0] sm:$0xff]
    %v115 = vld [vmem:[%s1 + $0x2d8] sm:$0xff]
    %v116 = vld [vmem:[%s1 + $0x2e0] sm:$0xff]
    %v117 = vld [vmem:[%s1 + $0x2e8] sm:$0xff]
    %v118 = vld [vmem:[%s1 + $0x2f0] sm:$0xff]
    %v119 = vld [vmem:[%s1 + $0x2f8] sm:$0xff]
    %120 = vmatprep.subr.mxu0 0.0
    %121 = vmatpush1.msra.mxu0 %v24
    %122 = vmatprep.subr.mxu0 0.0
    %123 = vmatpush1.msra.mxu0 %v25
    %124 = vmatprep.subr.mxu0 0.0
    %125 = vmatpush1.msra.mxu0 %v26
    %126 = vmatprep.subr.mxu0 0.0
    %127 = vmatpush1.msra.mxu0 %v27
    %128 = vmatprep.subr.mxu0 0.0
    %129 = vmatpush1.msra.mxu0 %v28
    %130 = vmatprep.subr.mxu0 0.0
    %131 = vmatpush1.msra.mxu0 %v29
    %132 = vmatprep.subr.mxu0 0.0
    %133 = vmatpush1.msra.mxu0 %v30
    %134 = vmatprep.subr.mxu0 0.0
    %135 = vmatpush1.msra.mxu0 %v31
    %136 = vmatprep.subr.mxu0 0.0
    %137 = vmatpush1.msra.mxu0 %v32
    %138 = vmatprep.subr.mxu0 0.0
    %139 = vmatpush1.msra.mxu0 %v33
    %140 = vmatprep.subr.mxu0 0.0
    %141 = vmatpush1.msra.mxu0 %v34
    %142 = vmatprep.subr.mxu0 0.0
    %143 = vmatpush1.msra.mxu0 %v35
    %144 = vmatprep.subr.mxu0 0.0
    %145 = vmatpush1.msra.mxu0 %v36
    %146 = vmatprep.subr.mxu0 0.0
    %147 = vmatpush1.msra.mxu0 %v37
    %148 = vmatprep.subr.mxu0 0.0
    %149 = vmatpush1.msra.mxu0 %v38
    %150 = vmatprep.subr.mxu0 0.0
    %151 = vmatpush1.msra.mxu0 %v39
    %152 = vmatprep.subr.mxu0 0.0
    %153 = vmatpush1.msra.mxu0 %v40
    %154 = vmatprep.subr.mxu0 0.0
    %155 = vmatpush1.msra.mxu0 %v41
    %156 = vmatprep.subr.mxu0 0.0
    %157 = vmatpush1.msra.mxu0 %v42
    %158 = vmatprep.subr.mxu0 0.0
    %159 = vmatpush1.msra.mxu0 %v43
    %160 = vmatprep.subr.mxu0 0.0
    %161 = vmatpush1.msra.mxu0 %v44
    %162 = vmatprep.subr.mxu0 0.0
    %163 = vmatpush1.msra.mxu0 %v45
    %164 = vmatprep.subr.mxu0 0.0
    %165 = vmatpush1.msra.mxu0 %v46
    %166 = vmatprep.subr.mxu0 0.0
    %167 = vmatpush1.msra.mxu0 %v47
    %168 = vmatprep.subr.mxu0 0.0
    %169 = vmatpush1.msra.mxu0 %v48
    %170 = vmatprep.subr.mxu0 0.0
    %171 = vmatpush1.msra.mxu0 %v49
    %172 = vmatprep.subr.mxu0 0.0
    %173 = vmatpush1.msra.mxu0 %v50
    %174 = vmatprep.subr.mxu0 0.0
    %175 = vmatpush1.msra.mxu0 %v51
    %176 = vmatprep.subr.mxu0 0.0
    %177 = vmatpush1.msra.mxu0 %v52
    %178 = vmatprep.subr.mxu0 0.0
    %179 = vmatpush1.msra.mxu0 %v53
    %180 = vmatprep.subr.mxu0 0.0
    %181 = vmatpush1.msra.mxu0 %v54
    %182 = vmatprep.subr.mxu0 0.0
    %183 = vmatpush1.msra.mxu0 %v55
    %184 = vmatprep.mubr.f32.mxu0 %v13
    %185 = vmatmul.mubr.f32.gmra.mrb[0].mxu0 %v12
    %v186 = vpop.f32.mrb[0].mxu0
    %v187 = vadd.f32 0.0, %v186
    %v188 = vpop.f32.mrb[0].mxu0
    %189 = vmatprep.mubr.f32.mxu0 %v19
    %190 = vmatmul.mubr.f32.gmra.mrb[0].mxu0 %v18
    %v191 = vpop.f32.mrb[0].mxu0
    %v192 = vadd.f32 0.0, %v191
    %v193 = vpop.f32.mrb[0].mxu0
    %194 = vdwg.mxu0
    %195 = vmatprep.subr.mxu0 0.0
    %196 = vmatpush1.msra.mxu0 %v56
    %197 = vmatprep.subr.mxu0 0.0
    %198 = vmatpush1.msra.mxu0 %v57
    %199 = vmatprep.subr.mxu0 0.0
    %200 = vmatpush1.msra.mxu0 %v58
    %201 = vmatprep.subr.mxu0 0.0
    %202 = vmatpush1.msra.mxu0 %v59
    %203 = vmatprep.subr.mxu0 0.0
    %204 = vmatpush1.msra.mxu0 %v60
    %205 = vmatprep.subr.mxu0 0.0
    %206 = vmatpush1.msra.mxu0 %v61
    %207 = vmatprep.subr.mxu0 0.0
    %208 = vmatpush1.msra.mxu0 %v62
    %209 = vmatprep.subr.mxu0 0.0
    %210 = vmatpush1.msra.mxu0 %v63
    %211 = vmatprep.subr.mxu0 0.0
    %212 = vmatpush1.msra.mxu0 %v64
    %213 = vmatprep.subr.mxu0 0.0
    %214 = vmatpush1.msra.mxu0 %v65
    %215 = vmatprep.subr.mxu0 0.0
    %216 = vmatpush1.msra.mxu0 %v66
    %217 = vmatprep.subr.mxu0 0.0
    %218 = vmatpush1.msra.mxu0 %v67
    %219 = vmatprep.subr.mxu0 0.0
    %220 = vmatpush1.msra.mxu0 %v68
    %221 = vmatprep.subr.mxu0 0.0
    %222 = vmatpush1.msra.mxu0 %v69
    %223 = vmatprep.subr.mxu0 0.0
    %224 = vmatpush1.msra.mxu0 %v70
    %225 = vmatprep.subr.mxu0 0.0
    %226 = vmatpush1.msra.mxu0 %v71
    %227 = vmatprep.subr.mxu0 0.0
    %228 = vmatpush1.msra.mxu0 %v72
    %229 = vmatprep.subr.mxu0 0.0
    %230 = vmatpush1.msra.mxu0 %v73
    %231 = vmatprep.subr.mxu0 0.0
    %232 = vmatpush1.msra.mxu0 %v74
    %233 = vmatprep.subr.mxu0 0.0
    %234 = vmatpush1.msra.mxu0 %v75
    %235 = vmatprep.subr.mxu0 0.0
    %236 = vmatpush1.msra.mxu0 %v76
    %237 = vmatprep.subr.mxu0 0.0
    %238 = vmatpush1.msra.mxu0 %v77
    %239 = vmatprep.subr.mxu0 0.0
    %240 = vmatpush1.msra.mxu0 %v78
    %241 = vmatprep.subr.mxu0 0.0
    %242 = vmatpush1.msra.mxu0 %v79
    %243 = vmatprep.subr.mxu0 0.0
    %244 = vmatpush1.msra.mxu0 %v80
    %245 = vmatprep.subr.mxu0 0.0
    %246 = vmatpush1.msra.mxu0 %v81
    %247 = vmatprep.subr.mxu0 0.0
    %248 = vmatpush1.msra.mxu0 %v82
    %249 = vmatprep.subr.mxu0 0.0
    %250 = vmatpush1.msra.mxu0 %v83
    %251 = vmatprep.subr.mxu0 0.0
    %252 = vmatpush1.msra.mxu0 %v84
    %253 = vmatprep.subr.mxu0 0.0
    %254 = vmatpush1.msra.mxu0 %v85
    %255 = vmatprep.subr.mxu0 0.0
    %256 = vmatpush1.msra.mxu0 %v86
    %257 = vmatprep.subr.mxu0 0.0
    %258 = vmatpush1.msra.mxu0 %v87
    %259 = vmatprep.mubr.f32.mxu0 %v15
    %260 = vmatmul.mubr.f32.gmra.mrb[0].mxu0 %v14
    %v261 = vpop.f32.mrb[0].mxu0
    %v262 = vadd.f32 %v187, %v261
    %v263 = vpop.f32.mrb[0].mxu0
    %264 = vmatprep.mubr.f32.mxu0 %v21
    %265 = vmatmul.mubr.f32.gmra.mrb[0].mxu0 %v20
    %v266 = vpop.f32.mrb[0].mxu0
    %v267 = vadd.f32 %v192, %v266
    %v268 = vpop.f32.mrb[0].mxu0
    %269 = vdwg.mxu0
    %270 = vmatprep.subr.mxu0 0.0
    %271 = vmatpush1.msra.mxu0 %v88
    %272 = vmatprep.subr.mxu0 0.0
    %273 = vmatpush1.msra.mxu0 %v89
    %274 = vmatprep.subr.mxu0 0.0
    %275 = vmatpush1.msra.mxu0 %v90
    %276 = vmatprep.subr.mxu0 0.0
    %277 = vmatpush1.msra.mxu0 %v91
    %278 = vmatprep.subr.mxu0 0.0
    %279 = vmatpush1.msra.mxu0 %v92
    %280 = vmatprep.subr.mxu0 0.0
    %281 = vmatpush1.msra.mxu0 %v93
    %282 = vmatprep.subr.mxu0 0.0
    %283 = vmatpush1.msra.mxu0 %v94
    %284 = vmatprep.subr.mxu0 0.0
    %285 = vmatpush1.msra.mxu0 %v95
    %286 = vmatprep.subr.mxu0 0.0
    %287 = vmatpush1.msra.mxu0 %v96
    %288 = vmatprep.subr.mxu0 0.0
    %289 = vmatpush1.msra.mxu0 %v97
    %290 = vmatprep.subr.mxu0 0.0
    %291 = vmatpush1.msra.mxu0 %v98
    %292 = vmatprep.subr.mxu0 0.0
    %293 = vmatpush1.msra.mxu0 %v99
    %294 = vmatprep.subr.mxu0 0.0
    %295 = vmatpush1.msra.mxu0 %v100
    %296 = vmatprep.subr.mxu0 0.0
    %297 = vmatpush1.msra.mxu0 %v101
    %298 = vmatprep.subr.mxu0 0.0
    %299 = vmatpush1.msra.mxu0 %v102
    %300 = vmatprep.subr.mxu0 0.0
    %301 = vmatpush1.msra.mxu0 %v103
    %302 = vmatprep.subr.mxu0 0.0
    %303 = vmatpush1.msra.mxu0 %v104
    %304 = vmatprep.subr.mxu0 0.0
    %305 = vmatpush1.msra.mxu0 %v105
    %306 = vmatprep.subr.mxu0 0.0
    %307 = vmatpush1.msra.mxu0 %v106
    %308 = vmatprep.subr.mxu0 0.0
    %309 = vmatpush1.msra.mxu0 %v107
    %310 = vmatprep.subr.mxu0 0.0
    %311 = vmatpush1.msra.mxu0 %v108
    %312 = vmatprep.subr.mxu0 0.0
    %313 = vmatpush1.msra.mxu0 %v109
    %314 = vmatprep.subr.mxu0 0.0
    %315 = vmatpush1.msra.mxu0 %v110
    %316 = vmatprep.subr.mxu0 0.0
    %317 = vmatpush1.msra.mxu0 %v111
    %318 = vmatprep.subr.mxu0 0.0
    %319 = vmatpush1.msra.mxu0 %v112
    %320 = vmatprep.subr.mxu0 0.0
    %321 = vmatpush1.msra.mxu0 %v113
    %322 = vmatprep.subr.mxu0 0.0
    %323 = vmatpush1.msra.mxu0 %v114
    %324 = vmatprep.subr.mxu0 0.0
    %325 = vmatpush1.msra.mxu0 %v115
    %326 = vmatprep.subr.mxu0 0.0
    %327 = vmatpush1.msra.mxu0 %v116
    %328 = vmatprep.subr.mxu0 0.0
    %329 = vmatpush1.msra.mxu0 %v117
    %330 = vmatprep.subr.mxu0 0.0
    %331 = vmatpush1.msra.mxu0 %v118
    %332 = vmatprep.subr.mxu0 0.0
    %333 = vmatpush1.msra.mxu0 %v119
    %334 = vmatprep.mubr.f32.mxu0 %v17
    %335 = vmatmul.mubr.f32.gmra.mrb[0].mxu0 %v16
    %v336 = vpop.f32.mrb[0].mxu0
    %v337 = vadd.f32 %v262, %v336
    %v338 = vpop.f32.mrb[0].mxu0
    %339 = vmatprep.mubr.f32.mxu0 %v23
    %340 = vmatmul.mubr.f32.gmra.mrb[0].mxu0 %v22
    %v341 = vpop.f32.mrb[0].mxu0
    %v342 = vadd.f32 %v267, %v341
    %v343 = vpop.f32.mrb[0].mxu0
    %344 = vdwg.mxu0
    %v345 = vmul.f32 %v337, %v337
    %v346 = vmul.f32 %v342, %v342
    %vm347 = vcmask 785408
    %v348 = vsel %vm347, %v345, 0.0
    %349 = vadd.xlane.f32.xlu0 %v348
    %v350 = vpop.xlane.xlu0 %349
    %v351 = vsel %vm347, %v346, 0.0
    %352 = vadd.xlane.f32.xlu0 %v351
    %v353 = vpop.xlane.xlu0 %352
    %v354 = vmax.f32 %v350, 1e-24
    %v355 = vmax.f32 %v353, 1e-24
    %v356 = vrsqrt.pop %v354
    %v357 = vrsqrt.pop %v355
    %v358 = vmul.f32 %v337, %v356
    %v359 = vmul.f32 %v342, %v357
    %360 = vst.msk [vmem:[#allocation2] sm:$0xff] %vm347, %v358
    %361 = vst.msk [vmem:[#allocation2 + $0x8] sm:$0xff] %vm347, %v359
    // Predicated region
    $region10: #{tpu_custom_call.1} parent=1 // pred_check
      _
    $region11: #{tpu_custom_call.1} parent=1 // pred_check_branch
      %363 = sbr.rel (0) target = $region13
    $region12: #{tpu_custom_call.1} parent=1 // pred_region
      %s365 = ssub.s32 256, 256
      %366 = vsyncadd [#allocation3], %s365
      %s367 = sshll.u32 [#allocation2], 4
      %s368 = int_to_ptr.vmem [resolvable:$true] %s367
      %373 = dma.vmem_to_hbm [thread:$0]  %s368, 256, %s2, [#allocation3], 128, 128, 8
    $region13: #{tpu_custom_call.1} parent=1 // pred_fallthru
      _
    // Predicated region
    $region14: #{tpu_custom_call.1} parent=1 // pred_check
      _
    $region15: #{tpu_custom_call.1} parent=1 // pred_check_branch
      %375 = sbr.rel (0) target = $region17
    $region16: #{tpu_custom_call.1} parent=1 // pred_region
      %376 = dma.done [#allocation3], 256
    $region17: #{tpu_custom_call.1} parent=1 // pred_fallthru
      _
    %377 = vsyncpa [#allocation3], 1

</llo_original>
